<compile_context>
chip_gen: v6e
topology: v6e:2x2x1
jax: 0.10.0
libtpu: 0.0.40
codegen_flags: <defaults>
</compile_context>

<pallas_src>
import jax
import jax.numpy as jnp
from jax.experimental import pallas as pl
from jax.experimental.pallas import tpu as pltpu


# ----------------------------------------------------------------------------
# VMEM-aware tiling constants
# ----------------------------------------------------------------------------
def _vmem_bytes():
    try:
        return int(pltpu.get_tpu_info().vmem_capacity_bytes)
    except Exception:
        return 64 * 1024 * 1024  # conservative (v7x per-core)


_VMEM_BYTES = _vmem_bytes()
_TILE_BUDGET = _VMEM_BYTES // 16          # per pipelined input buffer
_VMEM_LIMIT = int(_VMEM_BYTES * 3 // 4)   # scoped VMEM limit for pallas_call


def _pick_tile_h(H, W, C, itemsize, budget):
    """Largest tile_h that divides H, is a multiple of 8 (or == H), fits budget."""
    if H * W * C * itemsize <= budget:
        return H
    max_th = max(8, budget // max(1, W * C * itemsize))
    for cand in range(min(int(max_th), H), 7, -1):
        if cand % 8 == 0 and H % cand == 0:
            return cand
    return H  # fallback: whole image


# ----------------------------------------------------------------------------
# Kernel 1: pooling (row means over W, col means over H) — one pass over x
# ----------------------------------------------------------------------------
def _make_pool_kernel(H):
    def kernel(x_ref, rowmean_ref, colmean_ref):
        h_idx = pl.program_id(1)
        x = x_ref[0].astype(jnp.float32)               # (th, W, C)

        # pool over W -> per-row means for this tile
        rowmean_ref[0] = jnp.mean(x, axis=1)           # (th, C)

        # pool over H -> accumulate col sums across H tiles
        @pl.when(h_idx == 0)
        def _init():
            colmean_ref[...] = jnp.zeros_like(colmean_ref)

        colmean_ref[0] += jnp.sum(x, axis=0)           # (W, C)

        @pl.when(h_idx == pl.num_programs(1) - 1)
        def _finalize():
            colmean_ref[...] = colmean_ref[...] * (1.0 / H)

    return kernel


# ----------------------------------------------------------------------------
# Kernel 2: CA trunk (1x1 conv + eval-BN folded + h_swish + 1x1 convs + sigmoid)
# Batched over every row/col of every batch element in ONE call.
# ----------------------------------------------------------------------------
def _trunk_kernel(ph_ref, pw_ref, w1_ref, b1_ref, wh_ref, bh_ref, ww_ref, bw_ref,
                  ah_ref, aw_ref):
    def _hswish(v):
        return v * (jnp.clip(v + 3.0, 0.0, 6.0) * (1.0 / 6.0))

    w1 = w1_ref[...]                                    # (C, mip), BN folded
    b1 = b1_ref[...]                                    # (1, mip)
    zh = _hswish(jnp.dot(ph_ref[...], w1, preferred_element_type=jnp.float32) + b1)
    zw = _hswish(jnp.dot(pw_ref[...], w1, preferred_element_type=jnp.float32) + b1)
    ah_ref[...] = jax.nn.sigmoid(
        jnp.dot(zh, wh_ref[...], preferred_element_type=jnp.float32) + bh_ref[...])
    aw_ref[...] = jax.nn.sigmoid(
        jnp.dot(zw, ww_ref[...], preferred_element_type=jnp.float32) + bw_ref[...])


# ----------------------------------------------------------------------------
# Kernel 3: apply attentions   A = F * F * a_h * a_w   (spatially tiled)
# ----------------------------------------------------------------------------
def _apply_kernel(x_ref, ah_ref, aw_ref, o_ref):
    x = x_ref[0].astype(jnp.float32)                    # (th, W, C)
    ah = ah_ref[0]                                      # (th, C)
    aw = aw_ref[0]                                      # (W, C)
    a = ah[:, None, :] * aw[None, :, :]                 # (th, W, C)
    o_ref[0] = (x * x * a).astype(o_ref.dtype)


# ----------------------------------------------------------------------------
# One pyramid level (NHWC)
# ----------------------------------------------------------------------------
def _ca_level_nhwc(x, pp):
    N, H, W, C = x.shape
    itemsize = jnp.dtype(x.dtype).itemsize
    th = _pick_tile_h(H, W, C, itemsize, _TILE_BUDGET)
    nh = H // th

    # ---- 1) pooling pass (reads x once)
    rowmean, colmean = pl.pallas_call(
        _make_pool_kernel(H),
        grid=(N, nh),
        in_specs=[pl.BlockSpec((1, th, W, C), lambda n, h: (n, h, 0, 0))],
        out_specs=(pl.BlockSpec((1, th, C), lambda n, h: (n, h, 0)),
                   pl.BlockSpec((1, W, C), lambda n, h: (n, 0, 0))),
        out_shape=(jax.ShapeDtypeStruct((N, H, C), jnp.float32),
                   jax.ShapeDtypeStruct((N, W, C), jnp.float32)),
        compiler_params=pltpu.CompilerParams(
            dimension_semantics=("parallel", "arbitrary"),
            vmem_limit_bytes=_VMEM_LIMIT),
    )(x)

    # ---- 2) tiny CA trunk: batched over all N*(H)+N*(W) positions, one call
    mip = pp["w1"].shape[1]
    ah_flat, aw_flat = pl.pallas_call(
        _trunk_kernel,
        out_shape=(jax.ShapeDtypeStruct((N * H, C), jnp.float32),
                   jax.ShapeDtypeStruct((N * W, C), jnp.float32)),
    )(rowmean.reshape(N * H, C), colmean.reshape(N * W, C),
      pp["w1"], pp["b1"], pp["wh"], pp["bh"], pp["ww"], pp["bw"])
    ah = ah_flat.reshape(N, H, C)
    aw = aw_flat.reshape(N, W, C)

    # ---- 3) elementwise apply (reads x once, writes A once, lane-dense C)
    a = pl.pallas_call(
        _apply_kernel,
        grid=(N, nh),
        in_specs=[pl.BlockSpec((1, th, W, C), lambda n, h: (n, h, 0, 0)),
                  pl.BlockSpec((1, th, C), lambda n, h: (n, h, 0)),
                  pl.BlockSpec((1, W, C), lambda n, h: (n, 0, 0))],
        out_specs=pl.BlockSpec((1, th, W, C), lambda n, h: (n, h, 0, 0)),
        out_shape=jax.ShapeDtypeStruct((N, H, W, C), x.dtype),
        compiler_params=pltpu.CompilerParams(
            dimension_semantics=("parallel", "parallel"),
            vmem_limit_bytes=_VMEM_LIMIT),
    )(x, ah, aw)
    return a


# ----------------------------------------------------------------------------
# Parameter preparation (glue): fold eval-mode BN into conv1, layout for NHWC.
# TODO(synk): BatchNorm2d is implemented in inference mode (running stats
#             folded into conv1); training-mode batch statistics are not done.
# ----------------------------------------------------------------------------
def _prep_level_params(p, eps=1e-5):
    mip, C = p["w1"].shape[0], p["w1"].shape[1]
    scale = p["bn_gamma"] / jnp.sqrt(p["bn_var"] + eps)            # (mip,)
    shift = p["bn_beta"] - p["bn_mean"] * scale                    # (mip,)
    w1 = p["w1"][:, :, 0, 0]                                       # (mip, C)
    w1f = (w1 * scale[:, None]).T                                  # (C, mip)
    b1f = (p["b1"] * scale + shift).reshape(1, mip)
    wh = p["w_h"][:, :, 0, 0].T                                    # (mip, C)
    bh = p["b_h"].reshape(1, C)
    ww = p["w_w"][:, :, 0, 0].T                                    # (mip, C)
    bw = p["b_w"].reshape(1, C)
    return dict(w1=w1f, b1=b1f, wh=wh, bh=bh, ww=ww, bw=bw)


def ca_pyramid_attentions_nhwc(inputs_nhwc, params):
    """Preferred entry point: list of (N, H, W, C) arrays, stays in NHWC."""
    return [_ca_level_nhwc(x, _prep_level_params(p))
            for x, p in zip(inputs_nhwc, params)]


def ca_pyramid_attentions(inputs_nchw, params):
    """PyTorch-layout entry point: list of (N, C, H, W). Transposes are glue;
    use ca_pyramid_attentions_nhwc if the surrounding model is NHWC."""
    outs = []
    for x, p in zip(inputs_nchw, params):
        a = _ca_level_nhwc(jnp.transpose(x, (0, 2, 3, 1)), _prep_level_params(p))
        outs.append(jnp.transpose(a, (0, 3, 1, 2)))
    return outs


# ----------------------------------------------------------------------------
# Deterministic synthetic parameters (shapes match the PyTorch CA modules)
# ----------------------------------------------------------------------------
def init_params(key, C=128, reduction=32, num_levels=5):
    mip = max(8, C // reduction)
    params = []
    for _ in range(num_levels):
        key, *ks = jax.random.split(key, 11)
        params.append(dict(
            w1=jax.random.normal(ks[0], (mip, C, 1, 1), jnp.float32) * 0.1,   # conv1
            b1=jax.random.normal(ks[1], (mip,), jnp.float32) * 0.1,
            bn_gamma=1.0 + jax.random.normal(ks[2], (mip,), jnp.float32) * 0.1,
            bn_beta=jax.random.normal(ks[3], (mip,), jnp.float32) * 0.1,
            bn_mean=jax.random.normal(ks[4], (mip,), jnp.float32) * 0.1,
            bn_var=jax.random.uniform(ks[5], (mip,), jnp.float32, 0.5, 1.5),
            w_h=jax.random.normal(ks[6], (C, mip, 1, 1), jnp.float32) * 0.1,  # conv_h
            b_h=jax.random.normal(ks[7], (C,), jnp.float32) * 0.1,
            w_w=jax.random.normal(ks[8], (C, mip, 1, 1), jnp.float32) * 0.1,  # conv_w
            b_w=jax.random.normal(ks[9], (C,), jnp.float32) * 0.1,
        ))
    return params


# ----------------------------------------------------------------------------
# Pure-JAX reference (NCHW), eval-mode BN — for the correctness check only
# ----------------------------------------------------------------------------
def _ref_forward(inputs_nchw, params, eps=1e-5):
    outs = []
    for x, p in zip(inputs_nchw, params):
        N, C, H, W = x.shape
        x_h = jnp.mean(x, axis=3)                               # (N, C, H)
        x_w = jnp.mean(x, axis=2)                               # (N, C, W)
        y = jnp.concatenate([x_h, x_w], axis=2)                 # (N, C, H+W)
        w1 = p["w1"][:, :, 0, 0]                                # (mip, C)
        y1 = jnp.einsum("ncl,mc->nml", y, w1) + p["b1"][None, :, None]
        y1 = ((y1 - p["bn_mean"][None, :, None])
              / jnp.sqrt(p["bn_var"] + eps)[None, :, None]
              * p["bn_gamma"][None, :, None] + p["bn_beta"][None, :, None])
        y1 = y1 * jax.nn.relu6(y1 + 3.0) / 6.0                  # h_swish
        yh, yw = y1[:, :, :H], y1[:, :, H:]
        wh = p["w_h"][:, :, 0, 0]                               # (C, mip)
        ww = p["w_w"][:, :, 0, 0]
        a_h = jax.nn.sigmoid(jnp.einsum("nml,cm->ncl", yh, wh) + p["b_h"][None, :, None])
        a_w = jax.nn.sigmoid(jnp.einsum("nml,cm->ncl", yw, ww) + p["b_w"][None, :, None])
        ca = x * a_w[:, :, None, :] * a_h[:, :, :, None]        # CA output
        outs.append(ca * x)                                     # pyramid: A = CA(F) * F
    return outs


if __name__ == "__main__":
    C = 128  # lane-dense channel dim (stand-in for channel_size=256); mip = 8
    shapes = [(2, C, 16, 16), (2, C, 8, 8), (2, C, 8, 8), (2, C, 4, 4), (2, C, 4, 4)]

    key = jax.random.PRNGKey(0)
    key, *xkeys = jax.random.split(key, len(shapes) + 1)
    inputs = [jax.random.normal(k, s, jnp.float32) for k, s in zip(xkeys, shapes)]
    params = init_params(jax.random.PRNGKey(42), C=C)

    outs = ca_pyramid_attentions(inputs, params)
    outs = [jax.block_until_ready(o) for o in outs]

    refs = _ref_forward(inputs, params)
    for o, r in zip(outs, refs):
        assert o.shape == r.shape and o.dtype == r.dtype
        assert jnp.allclose(o, r, rtol=2e-3, atol=2e-3), "mismatch vs reference"

    print("KERNEL_OK")
</pallas_src>

<mosaic_0001>
module attributes {stable_mosaic.version = 11 : i64} {
  func.func @kernel(%arg0: i32, %arg1: i32, %arg2: memref<1x16x16x128xf32, #tpu.memory_space<vmem>>, %arg3: memref<1x16x128xf32, #tpu.memory_space<vmem>>, %arg4: memref<1x16x128xf32, #tpu.memory_space<vmem>>) attributes {dimension_semantics = [#tpu.dimension_semantics<parallel>, #tpu.dimension_semantics<arbitrary>], iteration_bounds = array<i64: 2, 1>, scalar_prefetch = 0 : i64, scratch_operands = 0 : i64, tpu.core_type = #tpu.core_type<tc>, window_params = [{transform_indices = @transform_0, window_bounds = array<i64: 1, 16, 16, 128>}, {transform_indices = @transform_1, window_bounds = array<i64: 1, 16, 128>}, {transform_indices = @transform_2, window_bounds = array<i64: 1, 16, 128>}]} {
    %c0 = arith.constant 0 : index
    %c0_0 = arith.constant 0 : index
    %c0_1 = arith.constant 0 : index
    %c0_2 = arith.constant 0 : index
    %0 = vector.load %arg2[%c0, %c0_0, %c0_1, %c0_2] : memref<1x16x16x128xf32, #tpu.memory_space<vmem>>, vector<1x16x16x128xf32>
    %1 = vector.shape_cast %0 : vector<1x16x16x128xf32> to vector<16x16x128xf32>
    %cst = arith.constant dense<0.000000e+00> : vector<16x128xf32>
    %2 = vector.multi_reduction <add>, %1, %cst [1] : vector<16x16x128xf32> to vector<16x128xf32>
    %cst_3 = arith.constant 1.600000e+01 : f32
    %3 = vector.broadcast %cst_3 : f32 to vector<16x128xf32>
    %4 = arith.divf %2, %3 : vector<16x128xf32>
    %c0_4 = arith.constant 0 : index
    %c0_5 = arith.constant 0 : index
    %c0_6 = arith.constant 0 : index
    %5 = vector.load %arg3[%c0_4, %c0_5, %c0_6] : memref<1x16x128xf32, #tpu.memory_space<vmem>>, vector<1x16x128xf32>
    %6 = vector.shape_cast %5 : vector<1x16x128xf32> to vector<16x128xf32>
    %7 = vector.shape_cast %4 : vector<16x128xf32> to vector<1x16x128xf32>
    tpu.vector_store %arg3[%c0_4, %c0_5, %c0_6], %7 {strides = array<i32>} : memref<1x16x128xf32, #tpu.memory_space<vmem>>, vector<1x16x128xf32>,
    %c0_i32 = arith.constant 0 : i32
    %8 = arith.cmpi eq, %arg1, %c0_i32 : i32
    %9 = arith.extui %8 : i1 to i32
    %c0_i32_7 = arith.constant 0 : i32
    %10 = arith.cmpi ne, %9, %c0_i32_7 : i32
    scf.if %10 {
      %cst_17 = arith.constant 0.000000e+00 : f32
      %21 = vector.broadcast %cst_17 : f32 to vector<1x16x128xf32>
      %c0_18 = arith.constant 0 : index
      %c0_19 = arith.constant 0 : index
      %c0_20 = arith.constant 0 : index
      %22 = vector.load %arg4[%c0_18, %c0_19, %c0_20] : memref<1x16x128xf32, #tpu.memory_space<vmem>>, vector<1x16x128xf32>
      tpu.vector_store %arg4[%c0_18, %c0_19, %c0_20], %21 {strides = array<i32>} : memref<1x16x128xf32, #tpu.memory_space<vmem>>, vector<1x16x128xf32>,
    } else {
    }
    %c0_8 = arith.constant 0 : index
    %c0_9 = arith.constant 0 : index
    %c0_10 = arith.constant 0 : index
    %11 = vector.load %arg4[%c0_8, %c0_9, %c0_10] : memref<1x16x128xf32, #tpu.memory_space<vmem>>, vector<1x16x128xf32>
    %12 = vector.shape_cast %11 : vector<1x16x128xf32> to vector<16x128xf32>
    %cst_11 = arith.constant dense<0.000000e+00> : vector<16x128xf32>
    %13 = vector.multi_reduction <add>, %1, %cst_11 [0] : vector<16x16x128xf32> to vector<16x128xf32>
    %14 = arith.addf %12, %13 : vector<16x128xf32>
    %c0_12 = arith.constant 0 : index
    %c0_13 = arith.constant 0 : index
    %c0_14 = arith.constant 0 : index
    %15 = vector.load %arg4[%c0_12, %c0_13, %c0_14] : memref<1x16x128xf32, #tpu.memory_space<vmem>>, vector<1x16x128xf32>
    %16 = vector.shape_cast %15 : vector<1x16x128xf32> to vector<16x128xf32>
    %17 = vector.shape_cast %14 : vector<16x128xf32> to vector<1x16x128xf32>
    tpu.vector_store %arg4[%c0_12, %c0_13, %c0_14], %17 {strides = array<i32>} : memref<1x16x128xf32, #tpu.memory_space<vmem>>, vector<1x16x128xf32>,
    %c0_i32_15 = arith.constant 0 : i32
    %18 = arith.cmpi eq, %arg1, %c0_i32_15 : i32
    %19 = arith.extui %18 : i1 to i32
    %c0_i32_16 = arith.constant 0 : i32
    %20 = arith.cmpi ne, %19, %c0_i32_16 : i32
    scf.if %20 {
      %c0_17 = arith.constant 0 : index
      %c0_18 = arith.constant 0 : index
      %c0_19 = arith.constant 0 : index
      %21 = vector.load %arg4[%c0_17, %c0_18, %c0_19] : memref<1x16x128xf32, #tpu.memory_space<vmem>>, vector<1x16x128xf32>
      %cst_20 = arith.constant 6.250000e-02 : f32
      %22 = vector.broadcast %cst_20 : f32 to vector<1x16x128xf32>
      %23 = arith.mulf %21, %22 : vector<1x16x128xf32>
      %c0_21 = arith.constant 0 : index
      %c0_22 = arith.constant 0 : index
      %c0_23 = arith.constant 0 : index
      %24 = vector.load %arg4[%c0_21, %c0_22, %c0_23] : memref<1x16x128xf32, #tpu.memory_space<vmem>>, vector<1x16x128xf32>
      tpu.vector_store %arg4[%c0_21, %c0_22, %c0_23], %23 {strides = array<i32>} : memref<1x16x128xf32, #tpu.memory_space<vmem>>, vector<1x16x128xf32>,
    } else {
    }
    return
  }
  func.func @transform_0(%arg0: i32, %arg1: i32) -> (i32, i32, i32, i32) {
    %c0_i32 = arith.constant 0 : i32
    %c0_i32_0 = arith.constant 0 : i32
    %c0_i32_1 = arith.constant 0 : i32
    return %arg0, %arg1, %c0_i32, %c0_i32_0 : i32, i32, i32, i32
  }
  func.func @transform_1(%arg0: i32, %arg1: i32) -> (i32, i32, i32) {
    %c0_i32 = arith.constant 0 : i32
    %c0_i32_0 = arith.constant 0 : i32
    return %arg0, %arg1, %c0_i32 : i32, i32, i32
  }
  func.func @transform_2(%arg0: i32, %arg1: i32) -> (i32, i32, i32) {
    %c0_i32 = arith.constant 0 : i32
    %c0_i32_0 = arith.constant 0 : i32
    %c0_i32_1 = arith.constant 0 : i32
    return %arg0, %c0_i32, %c0_i32_0 : i32, i32, i32
  }
}

</mosaic_0001>

<llo_original>
// kernel: tpu_custom_call.1
$region0: #{tpu_custom_call.1}
  #allocation0 [shape = 'u32[]', space=smem, size = 0x4, offset = 0x4, fixed_abs, tag = 'smem constant byte address 0x4 - core index']
  #allocation1 [shape = 'u32[144,128]{1,0:T(1,128)}', space=vmem, size = 0x12000, scoped, tag = 'internal scratch']
  %s0 = inlined_call_operand.hbm [shape: f32[2,16,16,128], index: 0, kind: input, shape index: {}]
  %s1 = inlined_call_operand.hbm [shape: f32[2,16,128], index: 1, kind: output, shape index: {0}]
  %s2 = inlined_call_operand.hbm [shape: f32[2,16,128], index: 2, kind: output, shape index: {1}]
  %3 = xla_tuple %s1, %s2
  %s4 = sld [smem:[#allocation0]]
  $region57: #{tpu_custom_call.1} parent=0
    _
  %s6 = ssub.s32 1, %s4
  %s7 = scalar_select 0, %s6, %s4
  $region1: #{tpu_custom_call.1} parent=0
    #allocation2 [shape = 'u8[262144]{0}', space=vmem, size = 0x40000, scoped, tag = 'input window, operand 0']
    #allocation3 [shape = 's32[2]{0}', space=sflag, size = 0x8, scoped, tag = 'scoped memory for tpu_custom_call.1']
    #allocation4 [shape = 's32[2]{0}', space=sflag, size = 0x8, scoped, tag = 'scoped memory for tpu_custom_call.1']
    #allocation5 [shape = 'u8[16384]{0}', space=vmem, size = 0x4000, scoped, tag = 'output window, operand 0']
    #allocation6 [shape = 'u8[16384]{0}', space=vmem, size = 0x4000, scoped, tag = 'output window, operand 1']
    #allocation7 [shape = 's32[2]{0}', space=sflag, size = 0x8, scoped, tag = 'scoped memory for tpu_custom_call.1']
    %8 = vsyncpa [#allocation3], 0
    %s9 = scalar_lea.sflag [#allocation3], 1
    %10 = vsyncpa %s9, 0
    %11 = vsyncpa [#allocation4], 0
    %s12 = scalar_lea.sflag [#allocation4], 1
    %13 = vsyncpa %s12, 0
    %14 = vsyncpa [#allocation7], 0
    %s15 = scalar_lea.sflag [#allocation7], 1
    %16 = vsyncpa %s15, 0
    loop: start=0, step=1, limit=4
    $region2: #{tpu_custom_call.1} parent=1 // loop_pre_header
      _
    $region3: #{tpu_custom_call.1} parent=1 // loop_header
      %s18 = sphi 0, %s22
      %p19 = scmp.ge.s32.totalorder %s18, 4
      %s25 = sphi 0, %s37
      %s26 = sphi 0, %s33
      %s27 = sphi 0, %s25
      %s28 = sphi 0, %s26
      %s29 = sphi 0, %s27
      %s30 = sphi 0, %s28
      %s42 = sphi 0, %s44
      %s45 = sphi 0, %s42
      %s46 = sphi 0, %s45
      %s62 = sphi 0, %s46
      %s70 = sphi 0, %s72
      %s73 = sphi 0, %s70
      %s74 = sphi 0, %s73
      %s90 = sphi 0, %s74
      %s96 = sphi 0, %s98
      %s99 = sphi 0, %s96
      %s100 = sphi 0, %s99
      %s116 = sphi 0, %s100
    $region4: #{tpu_custom_call.1} parent=1 // loop_header_branch
      %21 = sbr.rel (%p19) target = $region8
    $region5: #{tpu_custom_call.1} parent=1 // loop_body
      %s23 = ssub.s32 %s18, 1
      %s24 = ssub.s32 %s18, 2
      %s31 = sadd.s32 1, %s26
      %p32 = scmp.ge.s32.totalorder %s31, 1
      %s33 = scalar_select %p32, 0, %s31
      %s34 = sadd.s32 1, %s25
      %s35 = scalar_select %p32, %s34, %s25
      %p36 = scmp.ge.s32.totalorder %s35, 2
      %s37 = scalar_select %p36, 0, %s35
      %s38 = ssub.s32 %s25, %s37
      %s39 = ssub.s32 %s26, %s33
      %s40 = sor.u32 %s38, %s39
      %p41 = scmp.eq.s32.totalorder %s40, 0
      %s43 = sadd.s32 %s42, 1
      %s44 = scalar_select %p41, %s42, %s43
      %p47 = pneg %p41
      %p48 = scmp.eq.s32.totalorder %s18, 1
      %p49 = por %p47, %p48
      %p50 = scmp.ne.s32.totalorder %s42, %s45
      %p51 = scmp.eq.s32.totalorder %s18, 0
      %p52 = por %p50, %p51
      %p53 = scmp.ne.s32.totalorder %s42, %s45
      %p54 = scmp.eq.s32.totalorder %s23, 1
      %p55 = por %p53, %p54
      %p56 = scmp.ne.s32.totalorder %s45, %s46
      %p57 = scmp.eq.s32.totalorder %s23, 0
      %p58 = por %p56, %p57
      %p59 = scmp.ne.s32.totalorder %s45, %s46
      %p60 = scmp.eq.s32.totalorder %s24, 1
      %p61 = por %p59, %p60
      %p63 = scmp.ne.s32.totalorder %s46, %s62
      %p64 = scmp.eq.s32.totalorder %s24, 0
      %p65 = por %p63, %p64
      %s66 = ssub.s32 %s25, %s37
      %s67 = ssub.s32 %s26, %s33
      %s68 = sor.u32 %s66, %s67
      %p69 = scmp.eq.s32.totalorder %s68, 0
      %s71 = sadd.s32 %s70, 1
      %s72 = scalar_select %p69, %s70, %s71
      %p75 = pneg %p69
      %p76 = scmp.eq.s32.totalorder %s18, 1
      %p77 = por %p75, %p76
      %p78 = scmp.ne.s32.totalorder %s70, %s73
      %p79 = scmp.eq.s32.totalorder %s18, 0
      %p80 = por %p78, %p79
      %p81 = scmp.ne.s32.totalorder %s70, %s73
      %p82 = scmp.eq.s32.totalorder %s23, 1
      %p83 = por %p81, %p82
      %p84 = scmp.ne.s32.totalorder %s73, %s74
      %p85 = scmp.eq.s32.totalorder %s23, 0
      %p86 = por %p84, %p85
      %p87 = scmp.ne.s32.totalorder %s73, %s74
      %p88 = scmp.eq.s32.totalorder %s24, 1
      %p89 = por %p87, %p88
      %p91 = scmp.ne.s32.totalorder %s74, %s90
      %p92 = scmp.eq.s32.totalorder %s24, 0
      %p93 = por %p91, %p92
      %s94 = ssub.s32 %s25, %s37
      %p95 = scmp.eq.s32.totalorder %s94, 0
      %s97 = sadd.s32 %s96, 1
      %s98 = scalar_select %p95, %s96, %s97
      %p101 = pneg %p95
      %p102 = scmp.eq.s32.totalorder %s18, 1
      %p103 = por %p101, %p102
      %p104 = scmp.ne.s32.totalorder %s96, %s99
      %p105 = scmp.eq.s32.totalorder %s18, 0
      %p106 = por %p104, %p105
      %p107 = scmp.ne.s32.totalorder %s96, %s99
      %p108 = scmp.eq.s32.totalorder %s23, 1
      %p109 = por %p107, %p108
      %p110 = scmp.ne.s32.totalorder %s99, %s100
      %p111 = scmp.eq.s32.totalorder %s23, 0
      %p112 = por %p110, %p111
      %p113 = scmp.ne.s32.totalorder %s99, %s100
      %p114 = scmp.eq.s32.totalorder %s24, 1
      %p115 = por %p113, %p114
      %p117 = scmp.ne.s32.totalorder %s100, %s116
      %p118 = scmp.eq.s32.totalorder %s24, 0
      %p119 = por %p117, %p118
      %p120 = scmp.le.s32.totalorder 1, %s18
      %p121 = scmp.lt.s32.totalorder %s18, 3
      %p122 = pnand %p120, %p121
      %p123 = pneg %p122
      // Predicated region
      $region9: #{tpu_custom_call.1} parent=5 // pred_check
        _
      $region10: #{tpu_custom_call.1} parent=5 // pred_check_branch
        %125 = sbr.rel (%p122) target = $region12
      $region11: #{tpu_custom_call.1} parent=5 // pred_region
        %s126 = ssub.s32 %s18, 1
      $region12: #{tpu_custom_call.1} parent=5 // pred_fallthru
        _
      %p127 = scmp.lt.s32.totalorder %s18, 2
      // Predicated region
      $region13: #{tpu_custom_call.1} parent=5 // pred_check
        %p128 = pneg %p127
      $region14: #{tpu_custom_call.1} parent=5 // pred_check_branch
        %130 = sbr.rel (%p128) target = $region16
      $region15: #{tpu_custom_call.1} parent=5 // pred_region
        // Predicated region
        $region17: #{tpu_custom_call.1} parent=15 // pred_check
          %p131 = pneg %p52
        $region18: #{tpu_custom_call.1} parent=15 // pred_check_branch
          %133 = sbr.rel (%p131) target = $region20
        $region19: #{tpu_custom_call.1} parent=15 // pred_region
          %s134 = sand.u32 %s42, 1
          %s135 = scalar_lea.sflag [#allocation3], %s134
          %s136 = sand.u32 %s42, 1
          %s137 = smul.addr %s136, 256
          %s138 = scalar_lea.vmem [#allocation2], %s137
          %s139 = smul.u32 16, %s26
          %s141 = ssub.s32 4096, 4096
          %142 = vsyncadd %s135, %s141
          %s143 = smul.addr %s139, 2
          %s144 = smul.addr %s25, 32
          %s145 = sadd.s32 %s143, %s144
          %s146 = smul.addr %s145, 128
          %s147 = scalar_lea.hbm %s0, %s146
          %s148 = sshll.u32 %s138, 4
          %s149 = int_to_ptr.vmem [resolvable:$true] %s148
          %154 = dma.hbm_to_vmem [thread:$0]  %s147, 4096, %s149, %s135, 128, 128, 8
        $region20: #{tpu_custom_call.1} parent=15 // pred_fallthru
          _
      $region16: #{tpu_custom_call.1} parent=5 // pred_fallthru
        _
      %p155 = scmp.le.s32.totalorder 1, %s18
      %p156 = scmp.lt.s32.totalorder %s18, 3
      %p157 = pnand %p155, %p156
      %p158 = pneg %p157
      // Predicated region
      $region21: #{tpu_custom_call.1} parent=5 // pred_check
        _
      $region22: #{tpu_custom_call.1} parent=5 // pred_check_branch
        %160 = sbr.rel (%p157) target = $region24
      $region23: #{tpu_custom_call.1} parent=5 // pred_region
        %s161 = ssub.s32 %s18, 1
        %s162 = sand.u32 %s45, 1
        %s163 = scalar_lea.sflag [#allocation3], %s162
        %s164 = sand.u32 %s45, 1
        %s165 = smul.addr %s164, 256
        %s166 = scalar_lea.vmem [#allocation2], %s165
        // Predicated region
        $region25: #{tpu_custom_call.1} parent=23 // pred_check
          %p167 = pneg %p58
        $region26: #{tpu_custom_call.1} parent=23 // pred_check_branch
          %169 = sbr.rel (%p167) target = $region28
        $region27: #{tpu_custom_call.1} parent=23 // pred_region
          %170 = dma.done %s163, 4096
        $region28: #{tpu_custom_call.1} parent=23 // pred_fallthru
          _
        %s171 = sand.u32 %s45, 1
        %s172 = scalar_lea.sflag [#allocation3], %s171
        %s173 = sand.u32 %s45, 1
        %s174 = smul.addr %s173, 256
        %s175 = scalar_lea.vmem [#allocation2], %s174
        %p176 = pneg %p58
        %p177 = pneg %p55
        %p178 = pneg %p86
        %p179 = pneg %p83
        %s180 = sand.u32 %s73, 1
        %s181 = scalar_lea.sflag [#allocation4], %s180
        %s182 = sand.u32 %s73, 1
        %s183 = smul.addr %s182, 16
        %s184 = scalar_lea.vmem [#allocation5], %s183
        %p185 = pneg %p112
        %p186 = pneg %p109
        %s187 = sand.u32 %s99, 1
        %s188 = scalar_lea.sflag [#allocation7], %s187
        %s189 = sand.u32 %s99, 1
        %s190 = smul.addr %s189, 16
        %s191 = scalar_lea.vmem [#allocation6], %s190
        %s192 = smul.u32 16, %s28
        %s193 = smul.u32 2, %s28
        %v194 = vld [vmem:[%s166] sm:$0xff]
        %v195 = vld [vmem:[%s166 + $0x8] sm:$0xff]
        %v196 = vld [vmem:[%s166 + $0x10] sm:$0xff]
        %v197 = vld [vmem:[%s166 + $0x18] sm:$0xff]
        %v198 = vld [vmem:[%s166 + $0x20] sm:$0xff]
        %v199 = vld [vmem:[%s166 + $0x28] sm:$0xff]
        %v200 = vld [vmem:[%s166 + $0x30] sm:$0xff]
        %v201 = vld [vmem:[%s166 + $0x38] sm:$0xff]
        %v202 = vld [vmem:[%s166 + $0x40] sm:$0xff]
        %v203 = vld [vmem:[%s166 + $0x48] sm:$0xff]
        %v204 = vld [vmem:[%s166 + $0x50] sm:$0xff]
        %v205 = vld [vmem:[%s166 + $0x58] sm:$0xff]
        %v206 = vld [vmem:[%s166 + $0x60] sm:$0xff]
        %v207 = vld [vmem:[%s166 + $0x68] sm:$0xff]
        %v208 = vld [vmem:[%s166 + $0x70] sm:$0xff]
        %v209 = vld [vmem:[%s166 + $0x78] sm:$0xff]
        %v210 = vld [vmem:[%s166 + $0x80] sm:$0xff]
        %v211 = vld [vmem:[%s166 + $0x88] sm:$0xff]
        %v212 = vld [vmem:[%s166 + $0x90] sm:$0xff]
        %v213 = vld [vmem:[%s166 + $0x98] sm:$0xff]
        %v214 = vld [vmem:[%s166 + $0xa0] sm:$0xff]
        %v215 = vld [vmem:[%s166 + $0xa8] sm:$0xff]
        %v216 = vld [vmem:[%s166 + $0xb0] sm:$0xff]
        %v217 = vld [vmem:[%s166 + $0xb8] sm:$0xff]
        %v218 = vld [vmem:[%s166 + $0xc0] sm:$0xff]
        %v219 = vld [vmem:[%s166 + $0xc8] sm:$0xff]
        %v220 = vld [vmem:[%s166 + $0xd0] sm:$0xff]
        %v221 = vld [vmem:[%s166 + $0xd8] sm:$0xff]
        %v222 = vld [vmem:[%s166 + $0xe0] sm:$0xff]
        %v223 = vld [vmem:[%s166 + $0xe8] sm:$0xff]
        %v224 = vld [vmem:[%s166 + $0xf0] sm:$0xff]
        %v225 = vld [vmem:[%s166 + $0xf8] sm:$0xff]
        %v226 = vadd.f32 %v194, %v195
        %v227 = vrot.slane %v226, 4
        %v228 = vadd.f32 %v226, %v227
        %v229 = vrot.slane %v228, 2
        %v230 = vadd.f32 %v228, %v229
        %v231 = vrot.slane %v230, 1
        %v232 = vadd.f32 %v230, %v231
        %v233 = vadd.f32 %v196, %v197
        %v234 = vrot.slane %v233, 4
        %v235 = vadd.f32 %v233, %v234
        %v236 = vrot.slane %v235, 2
        %v237 = vadd.f32 %v235, %v236
        %v238 = vrot.slane %v237, 1
        %v239 = vadd.f32 %v237, %v238
        %v240 = vadd.f32 %v198, %v199
        %v241 = vrot.slane %v240, 4
        %v242 = vadd.f32 %v240, %v241
        %v243 = vrot.slane %v242, 2
        %v244 = vadd.f32 %v242, %v243
        %v245 = vrot.slane %v244, 1
        %v246 = vadd.f32 %v244, %v245
        %v247 = vadd.f32 %v200, %v201
        %v248 = vrot.slane %v247, 4
        %v249 = vadd.f32 %v247, %v248
        %v250 = vrot.slane %v249, 2
        %v251 = vadd.f32 %v249, %v250
        %v252 = vrot.slane %v251, 1
        %v253 = vadd.f32 %v251, %v252
        %v254 = vadd.f32 %v202, %v203
        %v255 = vrot.slane %v254, 4
        %v256 = vadd.f32 %v254, %v255
        %v257 = vrot.slane %v256, 2
        %v258 = vadd.f32 %v256, %v257
        %v259 = vrot.slane %v258, 1
        %v260 = vadd.f32 %v258, %v259
        %v261 = vadd.f32 %v204, %v205
        %v262 = vrot.slane %v261, 4
        %v263 = vadd.f32 %v261, %v262
        %v264 = vrot.slane %v263, 2
        %v265 = vadd.f32 %v263, %v264
        %v266 = vrot.slane %v265, 1
        %v267 = vadd.f32 %v265, %v266
        %v268 = vadd.f32 %v206, %v207
        %v269 = vrot.slane %v268, 4
        %v270 = vadd.f32 %v268, %v269
        %v271 = vrot.slane %v270, 2
        %v272 = vadd.f32 %v270, %v271
        %v273 = vrot.slane %v272, 1
        %v274 = vadd.f32 %v272, %v273
        %v275 = vadd.f32 %v208, %v209
        %v276 = vrot.slane %v275, 4
        %v277 = vadd.f32 %v275, %v276
        %v278 = vrot.slane %v277, 2
        %v279 = vadd.f32 %v277, %v278
        %v280 = vrot.slane %v279, 1
        %v281 = vadd.f32 %v279, %v280
        %v282 = vadd.f32 %v210, %v211
        %v283 = vrot.slane %v282, 4
        %v284 = vadd.f32 %v282, %v283
        %v285 = vrot.slane %v284, 2
        %v286 = vadd.f32 %v284, %v285
        %v287 = vrot.slane %v286, 1
        %v288 = vadd.f32 %v286, %v287
        %v289 = vadd.f32 %v212, %v213
        %v290 = vrot.slane %v289, 4
        %v291 = vadd.f32 %v289, %v290
        %v292 = vrot.slane %v291, 2
        %v293 = vadd.f32 %v291, %v292
        %v294 = vrot.slane %v293, 1
        %v295 = vadd.f32 %v293, %v294
        %v296 = vadd.f32 %v214, %v215
        %v297 = vrot.slane %v296, 4
        %v298 = vadd.f32 %v296, %v297
        %v299 = vrot.slane %v298, 2
        %v300 = vadd.f32 %v298, %v299
        %v301 = vrot.slane %v300, 1
        %v302 = vadd.f32 %v300, %v301
        %v303 = vadd.f32 %v216, %v217
        %v304 = vrot.slane %v303, 4
        %v305 = vadd.f32 %v303, %v304
        %v306 = vrot.slane %v305, 2
        %v307 = vadd.f32 %v305, %v306
        %v308 = vrot.slane %v307, 1
        %v309 = vadd.f32 %v307, %v308
        %v310 = vadd.f32 %v218, %v219
        %v311 = vrot.slane %v310, 4
        %v312 = vadd.f32 %v310, %v311
        %v313 = vrot.slane %v312, 2
        %v314 = vadd.f32 %v312, %v313
        %v315 = vrot.slane %v314, 1
        %v316 = vadd.f32 %v314, %v315
        %v317 = vadd.f32 %v220, %v221
        %v318 = vrot.slane %v317, 4
        %v319 = vadd.f32 %v317, %v318
        %v320 = vrot.slane %v319, 2
        %v321 = vadd.f32 %v319, %v320
        %v322 = vrot.slane %v321, 1
        %v323 = vadd.f32 %v321, %v322
        %v324 = vadd.f32 %v222, %v223
        %v325 = vrot.slane %v324, 4
        %v326 = vadd.f32 %v324, %v325
        %v327 = vrot.slane %v326, 2
        %v328 = vadd.f32 %v326, %v327
        %v329 = vrot.slane %v328, 1
        %v330 = vadd.f32 %v328, %v329
        %v331 = vadd.f32 %v224, %v225
        %v332 = vrot.slane %v331, 4
        %v333 = vadd.f32 %v331, %v332
        %v334 = vrot.slane %v333, 2
        %v335 = vadd.f32 %v333, %v334
        %v336 = vrot.slane %v335, 1
        %v337 = vadd.f32 %v335, %v336
        %v338 = vrcp.pop 16.0
        %v339 = vmul.f32 %v232, %v338
        %v340 = vmul.f32 %v239, %v338
        %v341 = vmul.f32 %v246, %v338
        %v342 = vmul.f32 %v253, %v338
        %v343 = vmul.f32 %v260, %v338
        %v344 = vmul.f32 %v267, %v338
        %v345 = vmul.f32 %v274, %v338
        %v346 = vmul.f32 %v281, %v338
        %v347 = vmul.f32 %v288, %v338
        %v348 = vmul.f32 %v295, %v338
        %v349 = vmul.f32 %v302, %v338
        %v350 = vmul.f32 %v309, %v338
        %v351 = vmul.f32 %v316, %v338
        %v352 = vmul.f32 %v323, %v338
        %v353 = vmul.f32 %v330, %v338
        %v354 = vmul.f32 %v337, %v338
        %vm371 = vcmask 1041409
        %v372 = vsel %vm371, %v340, %v339
        %vm373 = vcmask 1042434
        %v374 = vsel %vm373, %v341, %v372
        %vm375 = vcmask 1043459
        %v376 = vsel %vm375, %v342, %v374
        %vm377 = vcmask 1044484
        %v378 = vsel %vm377, %v343, %v376
        %vm379 = vcmask 1045509
        %v380 = vsel %vm379, %v344, %v378
        %vm381 = vcmask 1046534
        %v382 = vsel %vm381, %v345, %v380
        %vm383 = vcmask 1047559
        %v384 = vsel %vm383, %v346, %v382
        %v385 = vsel %vm371, %v348, %v347
        %v386 = vsel %vm373, %v349, %v385
        %v387 = vsel %vm375, %v350, %v386
        %v388 = vsel %vm377, %v351, %v387
        %v389 = vsel %vm379, %v352, %v388
        %v390 = vsel %vm381, %v353, %v389
        %v391 = vsel %vm383, %v354, %v390
        %394 = vst [vmem:[%s184] sm:$0xff] %v384
        %395 = vst [vmem:[%s184 + $0x8] sm:$0xff] %v391
        %p396 = scmp.eq.s32.totalorder %s28, 0
        // Predicated region
        $region29: #{tpu_custom_call.1} parent=23 // pred_check
          %p397 = pneg %p396
        $region30: #{tpu_custom_call.1} parent=23 // pred_check_branch
          %399 = sbr.rel (%p397) target = $region32
        $region31: #{tpu_custom_call.1} parent=23 // pred_region
          %400 = vst [vmem:[%s191] sm:$0xff] 0.0
          %401 = vst [vmem:[%s191 + $0x8] sm:$0xff] 0.0
        $region32: #{tpu_custom_call.1} parent=23 // pred_fallthru
          _
        %v402 = vld [vmem:[%s191] sm:$0xff]
        %v403 = vld [vmem:[%s191 + $0x8] sm:$0xff]
        %v404 = vadd.f32 %v194, %v196
        %v405 = vadd.f32 %v404, %v198
        %v406 = vadd.f32 %v405, %v200
        %v407 = vadd.f32 %v406, %v202
        %v408 = vadd.f32 %v407, %v204
        %v409 = vadd.f32 %v408, %v206
        %v410 = vadd.f32 %v409, %v208
        %v411 = vadd.f32 %v410, %v210
        %v412 = vadd.f32 %v411, %v212
        %v413 = vadd.f32 %v412, %v214
        %v414 = vadd.f32 %v413, %v216
        %v415 = vadd.f32 %v414, %v218
        %v416 = vadd.f32 %v415, %v220
        %v417 = vadd.f32 %v416, %v222
        %v418 = vadd.f32 %v417, %v224
        %v419 = vadd.f32 %v195, %v197
        %v420 = vadd.f32 %v419, %v199
        %v421 = vadd.f32 %v420, %v201
        %v422 = vadd.f32 %v421, %v203
        %v423 = vadd.f32 %v422, %v205
        %v424 = vadd.f32 %v423, %v207
        %v425 = vadd.f32 %v424, %v209
        %v426 = vadd.f32 %v425, %v211
        %v427 = vadd.f32 %v426, %v213
        %v428 = vadd.f32 %v427, %v215
        %v429 = vadd.f32 %v428, %v217
        %v430 = vadd.f32 %v429, %v219
        %v431 = vadd.f32 %v430, %v221
        %v432 = vadd.f32 %v431, %v223
        %v433 = vadd.f32 %v432, %v225
        %v434 = vadd.f32 %v402, %v418
        %v435 = vadd.f32 %v403, %v433
        %436 = vst [vmem:[%s191] sm:$0xff] %v434
        %437 = vst [vmem:[%s191 + $0x8] sm:$0xff] %v435
        // Predicated region
        $region33: #{tpu_custom_call.1} parent=23 // pred_check
          %p438 = pneg %p396
        $region34: #{tpu_custom_call.1} parent=23 // pred_check_branch
          %440 = sbr.rel (%p438) target = $region36
        $region35: #{tpu_custom_call.1} parent=23 // pred_region
          %v441 = vld [vmem:[%s191] sm:$0xff]
          %v442 = vld [vmem:[%s191 + $0x8] sm:$0xff]
          %v443 = vmul.f32 %v441, 0.0625
          %v444 = vmul.f32 %v442, 0.0625
          %445 = vst [vmem:[%s191] sm:$0xff] %v443
          %446 = vst [vmem:[%s191 + $0x8] sm:$0xff] %v444
        $region36: #{tpu_custom_call.1} parent=23 // pred_fallthru
          _
        %s447 = sand.u32 %s73, 1
        %s448 = scalar_lea.sflag [#allocation4], %s447
        %s449 = sand.u32 %s73, 1
        %s450 = smul.addr %s449, 16
        %s451 = scalar_lea.vmem [#allocation5], %s450
        %s452 = sand.u32 %s99, 1
        %s453 = scalar_lea.sflag [#allocation7], %s452
        %s454 = sand.u32 %s99, 1
        %s455 = smul.addr %s454, 16
        %s456 = scalar_lea.vmem [#allocation6], %s455
        // Predicated region
        $region37: #{tpu_custom_call.1} parent=23 // pred_check
          %p457 = pneg %p83
        $region38: #{tpu_custom_call.1} parent=23 // pred_check_branch
          %459 = sbr.rel (%p457) target = $region40
        $region39: #{tpu_custom_call.1} parent=23 // pred_region
          %s460 = smul.u32 2, %s28
          %s462 = ssub.s32 256, 256
          %463 = vsyncadd %s448, %s462
          %s464 = smul.addr %s27, 2
          %s465 = sadd.s32 %s460, %s464
          %s466 = smul.addr %s465, 128
          %s467 = scalar_lea.hbm %s1, %s466
          %s468 = sshll.u32 %s451, 4
          %s469 = int_to_ptr.vmem [resolvable:$true] %s468
          %474 = dma.vmem_to_hbm [thread:$0]  %s469, 256, %s467, %s448, 128, 128, 8
        $region40: #{tpu_custom_call.1} parent=23 // pred_fallthru
          _
        // Predicated region
        $region41: #{tpu_custom_call.1} parent=23 // pred_check
          %p475 = pneg %p109
        $region42: #{tpu_custom_call.1} parent=23 // pred_check_branch
          %477 = sbr.rel (%p475) target = $region44
        $region43: #{tpu_custom_call.1} parent=23 // pred_region
          %s479 = ssub.s32 256, 256
          %480 = vsyncadd %s453, %s479
          %s481 = smul.addr %s27, 2
          %s482 = smul.addr %s481, 128
          %s483 = scalar_lea.hbm %s2, %s482
          %s484 = sshll.u32 %s456, 4
          %s485 = int_to_ptr.vmem [resolvable:$true] %s484
          %490 = dma.vmem_to_hbm [thread:$0]  %s485, 256, %s483, %s453, 128, 128, 8
        $region44: #{tpu_custom_call.1} parent=23 // pred_fallthru
          _
      $region24: #{tpu_custom_call.1} parent=5 // pred_fallthru
        _
      %p491 = scmp.le.s32.totalorder 2, %s18
      // Predicated region
      $region45: #{tpu_custom_call.1} parent=5 // pred_check
        %p492 = pneg %p491
      $region46: #{tpu_custom_call.1} parent=5 // pred_check_branch
        %494 = sbr.rel (%p492) target = $region48
      $region47: #{tpu_custom_call.1} parent=5 // pred_region
        %s495 = ssub.s32 %s18, 2
        // Predicated region
        $region49: #{tpu_custom_call.1} parent=47 // pred_check
          %p496 = pneg %p89
        $region50: #{tpu_custom_call.1} parent=47 // pred_check_branch
          %498 = sbr.rel (%p496) target = $region52
        $region51: #{tpu_custom_call.1} parent=47 // pred_region
          %s499 = sand.u32 %s74, 1
          %s500 = scalar_lea.sflag [#allocation4], %s499
          %s501 = sand.u32 %s74, 1
          %s502 = smul.addr %s501, 16
          %s503 = scalar_lea.vmem [#allocation5], %s502
          %504 = dma.done %s500, 256
        $region52: #{tpu_custom_call.1} parent=47 // pred_fallthru
          _
        // Predicated region
        $region53: #{tpu_custom_call.1} parent=47 // pred_check
          %p505 = pneg %p115
        $region54: #{tpu_custom_call.1} parent=47 // pred_check_branch
          %507 = sbr.rel (%p505) target = $region56
        $region55: #{tpu_custom_call.1} parent=47 // pred_region
          %s508 = sand.u32 %s100, 1
          %s509 = scalar_lea.sflag [#allocation7], %s508
          %s510 = sand.u32 %s100, 1
          %s511 = smul.addr %s510, 16
          %s512 = scalar_lea.vmem [#allocation6], %s511
          %513 = dma.done %s509, 256
        $region56: #{tpu_custom_call.1} parent=47 // pred_fallthru
          _
      $region48: #{tpu_custom_call.1} parent=5 // pred_fallthru
        _
    $region6: #{tpu_custom_call.1} parent=1 // loop_footer
      %s22 = sadd.s32 1, %s18
    $region7: #{tpu_custom_call.1} parent=1 // loop_footer_branch
      %17 = sbr.rel target = $region3
    $region8: #{tpu_custom_call.1} parent=1 // loop_exit
      _
    %514 = vsyncpa [#allocation3], 1
    %s515 = scalar_lea.sflag [#allocation3], 1
    %516 = vsyncpa %s515, 1
    %517 = vsyncpa [#allocation4], 1
    %s518 = scalar_lea.sflag [#allocation4], 1
    %519 = vsyncpa %s518, 1
    %520 = vsyncpa [#allocation7], 1
    %s521 = scalar_lea.sflag [#allocation7], 1
    %522 = vsyncpa %s521, 1

</llo_original>
